<compile_context>
chip_gen: v5e
topology: v5e:2x2
jax: 0.10.0
libtpu: 0.0.40
codegen_flags: <defaults>
</compile_context>

<pallas_src>
import functools

import jax
import jax.numpy as jnp
from jax.experimental import pallas as pl
from jax.experimental.pallas import tpu as pltpu


def _conv1x1_kernel(x_ref, w_ref, b_ref, o_ref, *, n_blk):
    # x_ref: (n_blk, C_in, T)  w_ref: (C_out, C_in)  b_ref: (C_out, 1)
    # o_ref: (n_blk, C_out, T)
    w = w_ref[...]
    b = b_ref[...].astype(jnp.float32)
    # n_blk is a small compile-time constant -> static unroll.
    for i in range(n_blk):
        xi = x_ref[i].astype(w.dtype)  # in-kernel cast (no extra HBM pass)
        acc = jnp.dot(w, xi, preferred_element_type=jnp.float32) + b
        o_ref[i] = acc.astype(o_ref.dtype)


def _physical_vmem_bytes():
    """Best-effort trace-time query of per-core VMEM capacity."""
    try:
        info = pltpu.get_tpu_info()
        for attr in ("vmem_capacity_bytes", "vmem_bytes", "vmem_size_bytes"):
            v = getattr(info, attr, None)
            if v:
                return int(v)
    except Exception:
        pass
    return 64 * 1024 * 1024  # conservative default (v7x per-TC)


def _vmem_budget_and_limit():
    """(tile budget, vmem_limit_bytes) per chip generation."""
    phys = _physical_vmem_bytes()
    if phys >= 96 * 1024 * 1024:
        # v5e / v6e: 128 MiB physical -> raise scoped limit to 64 MiB.
        limit = 64 * 1024 * 1024
    else:
        # v7x: 64 MiB physical -> leave room for compiler scratch.
        limit = 48 * 1024 * 1024
    budget = limit - 8 * 1024 * 1024  # headroom for compiler-internal scratch
    return budget, limit


def _pick_blocks(n, hw, c_in, c_out, x_itemsize, out_itemsize, w_itemsize, budget):
    """Choose (n_blk, hw_tile) filling the VMEM budget.

    Footprint model: double-buffered x and out blocks (BlockSpec pipelining)
    plus the resident weight/bias (also double-buffered by default).
    """
    lane = 128
    # TODO(synk): mark weight/bias BlockSpecs pipeline_mode=pl.Buffered(1)
    # (constant index_map) to halve their residency once channels reach ~1-2K.
    fixed = 2 * (c_out * c_in * w_itemsize + c_out * 4)
    per_px = c_in * x_itemsize + c_out * out_itemsize  # bytes/pixel per buffer

    def fits(n_blk, tile):
        return fixed + 2 * n_blk * tile * per_px <= budget

    # 1) Whole-image HW tile if it fits: full-extent last dim is always
    #    layout-legal and divides HW exactly (no masked stores).
    if fits(1, hw):
        n_blk = 1
        for d in range(1, n + 1):  # grow over divisors of N (no ragged N block)
            if n % d == 0 and fits(d, hw):
                n_blk = d
        return n_blk, hw

    # 2) HW must be tiled: largest lane-multiple tile within budget.
    max_tile = (budget - fixed) // (2 * per_px)
    max_tile = max(lane, (max_tile // lane) * lane)
    max_tile = min(max_tile, max(lane, (hw // lane) * lane))
    # Prefer an exact divisor of HW (avoids masked vst on the final tile).
    best_div = 0
    t = lane
    while t <= max_tile:
        if hw % t == 0:
            best_div = t
        t += lane
    tile = best_div if best_div else max_tile
    # TODO(synk): for very large C_in/C_out (thousands), first add a parallel
    # C_out-block grid axis (256-wide on v6e/v7x, 128 on v5e); only tile C_in
    # (reduction axis + f32 accumulator) if C_in alone overflows VMEM.
    return 1, tile


def crossscale_forward(x_nchw, weight, bias, *, compute_dtype=None):
    """1x1 conv forward (Crossscale).

    Args:
      x_nchw: (N, C_in, H, W) input.
      weight: (C_out, C_in, 1, 1) conv weight (PyTorch layout).
      bias:   (C_out,) conv bias.
      compute_dtype: optional matmul dtype (e.g. jnp.bfloat16). x is cast
        in-kernel (after the VMEM load, no extra HBM pass); only the tiny
        weight is pre-cast. Accumulation stays f32; output keeps input dtype.
    Returns:
      (N, C_out, H, W) output.
    """
    N, C_in, H, W = x_nchw.shape
    C_out = weight.shape[0]
    HW = H * W
    out_dtype = x_nchw.dtype

    # Glue: pure reshapes only (no transposes, no extra HBM passes over x).
    x = x_nchw.reshape(N, C_in, HW)
    w = weight.reshape(C_out, C_in)
    b = bias.reshape(C_out, 1).astype(jnp.float32)
    if compute_dtype is not None:
        w = w.astype(compute_dtype)  # tiny; cheap to pre-cast

    x_itemsize = jnp.dtype(x.dtype).itemsize
    out_itemsize = jnp.dtype(out_dtype).itemsize
    w_itemsize = jnp.dtype(w.dtype).itemsize

    budget, vmem_limit = _vmem_budget_and_limit()
    n_blk, tile = _pick_blocks(
        N, HW, C_in, C_out, x_itemsize, out_itemsize, w_itemsize, budget
    )
    grid = (pl.cdiv(N, n_blk), pl.cdiv(HW, tile))

    flops = 2 * N * HW * C_in * C_out
    bytes_accessed = (
        x.size * x_itemsize
        + N * C_out * HW * out_itemsize
        + w.size * w_itemsize
        + b.size * 4
    )

    out = pl.pallas_call(
        functools.partial(_conv1x1_kernel, n_blk=n_blk),
        out_shape=jax.ShapeDtypeStruct((N, C_out, HW), out_dtype),
        grid_spec=pltpu.PrefetchScalarGridSpec(
            num_scalar_prefetch=0,
            grid=grid,
            in_specs=[
                pl.BlockSpec((n_blk, C_in, tile), lambda n, j: (n, 0, j)),
                pl.BlockSpec((C_out, C_in), lambda n, j: (0, 0)),
                pl.BlockSpec((C_out, 1), lambda n, j: (0, 0)),
            ],
            out_specs=pl.BlockSpec((n_blk, C_out, tile), lambda n, j: (n, 0, j)),
        ),
        compiler_params=pltpu.CompilerParams(
            # Both axes independent -> shard across v7x's two TensorCores.
            dimension_semantics=("parallel", "parallel"),
            vmem_limit_bytes=vmem_limit,
        ),
        cost_estimate=pl.CostEstimate(
            flops=flops, transcendentals=0, bytes_accessed=bytes_accessed
        ),
    )(x, w, b)

    # Glue: (N, C_out, H*W) -> NCHW is a pure reshape.
    return out.reshape(N, C_out, H, W)


def _reference_conv1x1(x_nchw, weight, bias):
    # Pure-JAX reference for correctness checking.
    w = weight.reshape(weight.shape[0], weight.shape[1])  # (C_out, C_in)
    y = jnp.einsum("nchw,oc->nohw", x_nchw, w)
    return y + bias[None, :, None, None]


if __name__ == "__main__":
    key = jax.random.PRNGKey(0)
    k_x, k_w, k_b = jax.random.split(key, 3)

    N, C_in, C_out, H, W = 2, 4, 8, 16, 16

    x = jax.random.normal(k_x, (N, C_in, H, W), dtype=jnp.float32)
    # Deterministic "kaiming-uniform-ish" init for a synthetic checkpoint.
    fan_in = C_in  # kernel_size = 1
    bound = 1.0 / (fan_in ** 0.5)
    weight = jax.random.uniform(
        k_w, (C_out, C_in, 1, 1), minval=-bound, maxval=bound, dtype=jnp.float32
    )
    bias = jax.random.uniform(
        k_b, (C_out,), minval=-bound, maxval=bound, dtype=jnp.float32
    )

    fwd = jax.jit(crossscale_forward)
    out = jax.block_until_ready(fwd(x, weight, bias))

    ref = _reference_conv1x1(x, weight, bias)
    assert out.shape == (N, C_out, H, W), out.shape
    assert jnp.allclose(out, ref, atol=1e-5, rtol=1e-5), "mismatch vs reference"

    print("KERNEL_OK")
</pallas_src>

<mosaic_0001>
module attributes {stable_mosaic.version = 11 : i64} {
  func.func @_conv1x1_kernel(%arg0: i32, %arg1: i32, %arg2: memref<2x4x256xf32, #tpu.memory_space<vmem>>, %arg3: memref<8x4xf32, #tpu.memory_space<vmem>>, %arg4: memref<8x1xf32, #tpu.memory_space<vmem>>, %arg5: memref<2x8x256xf32, #tpu.memory_space<vmem>>) attributes {dimension_semantics = [#tpu.dimension_semantics<parallel>, #tpu.dimension_semantics<parallel>], iteration_bounds = array<i64: 1, 1>, scalar_prefetch = 0 : i64, scratch_operands = 0 : i64, tpu.core_type = #tpu.core_type<tc>, window_params = [{transform_indices = @transform_0, window_bounds = array<i64: 2, 4, 256>}, {pipeline_mode = #tpu.pipeline_mode<synchronous>, transform_indices = @transform_1, window_bounds = array<i64: 8, 4>}, {pipeline_mode = #tpu.pipeline_mode<synchronous>, transform_indices = @transform_2, window_bounds = array<i64: 8, 1>}, {transform_indices = @transform_3, window_bounds = array<i64: 2, 8, 256>}]} {
    %c0 = arith.constant 0 : index
    %c0_0 = arith.constant 0 : index
    %0 = vector.load %arg3[%c0, %c0_0] : memref<8x4xf32, #tpu.memory_space<vmem>>, vector<8x4xf32>
    %c0_1 = arith.constant 0 : index
    %c0_2 = arith.constant 0 : index
    %1 = vector.load %arg4[%c0_1, %c0_2] : memref<8x1xf32, #tpu.memory_space<vmem>>, vector<8x1xf32>
    %c0_3 = arith.constant 0 : index
    %c0_4 = arith.constant 0 : index
    %c0_5 = arith.constant 0 : index
    %2 = vector.load %arg2[%c0_3, %c0_4, %c0_5] : memref<2x4x256xf32, #tpu.memory_space<vmem>>, vector<1x4x256xf32>
    %3 = vector.shape_cast %2 : vector<1x4x256xf32> to vector<4x256xf32>
    %cst = arith.constant dense<0.000000e+00> : vector<8x256xf32>
    %4 = tpu.matmul %0, %3, %cst {dimension_numbers = #tpu.dot_dimension_numbers<[1], [0], [0], [1], [0, 0, 1, 1], [], []>} : vector<8x4xf32>, vector<4x256xf32>, vector<8x256xf32> -> vector<8x256xf32>
    %5 = vector.broadcast %1 : vector<8x1xf32> to vector<8x256xf32>
    %6 = arith.addf %4, %5 : vector<8x256xf32>
    %c0_6 = arith.constant 0 : index
    %c0_7 = arith.constant 0 : index
    %c0_8 = arith.constant 0 : index
    %7 = vector.load %arg5[%c0_6, %c0_7, %c0_8] : memref<2x8x256xf32, #tpu.memory_space<vmem>>, vector<1x8x256xf32>
    %8 = vector.shape_cast %7 : vector<1x8x256xf32> to vector<8x256xf32>
    %9 = vector.shape_cast %6 : vector<8x256xf32> to vector<1x8x256xf32>
    tpu.vector_store %arg5[%c0_6, %c0_7, %c0_8], %9 {strides = array<i32>} : memref<2x8x256xf32, #tpu.memory_space<vmem>>, vector<1x8x256xf32>,
    %c1 = arith.constant 1 : index
    %c0_9 = arith.constant 0 : index
    %c0_10 = arith.constant 0 : index
    %10 = vector.load %arg2[%c1, %c0_9, %c0_10] : memref<2x4x256xf32, #tpu.memory_space<vmem>>, vector<1x4x256xf32>
    %11 = vector.shape_cast %10 : vector<1x4x256xf32> to vector<4x256xf32>
    %cst_11 = arith.constant dense<0.000000e+00> : vector<8x256xf32>
    %12 = tpu.matmul %0, %11, %cst_11 {dimension_numbers = #tpu.dot_dimension_numbers<[1], [0], [0], [1], [0, 0, 1, 1], [], []>} : vector<8x4xf32>, vector<4x256xf32>, vector<8x256xf32> -> vector<8x256xf32>
    %13 = vector.broadcast %1 : vector<8x1xf32> to vector<8x256xf32>
    %14 = arith.addf %12, %13 : vector<8x256xf32>
    %c1_12 = arith.constant 1 : index
    %c0_13 = arith.constant 0 : index
    %c0_14 = arith.constant 0 : index
    %15 = vector.load %arg5[%c1_12, %c0_13, %c0_14] : memref<2x8x256xf32, #tpu.memory_space<vmem>>, vector<1x8x256xf32>
    %16 = vector.shape_cast %15 : vector<1x8x256xf32> to vector<8x256xf32>
    %17 = vector.shape_cast %14 : vector<8x256xf32> to vector<1x8x256xf32>
    tpu.vector_store %arg5[%c1_12, %c0_13, %c0_14], %17 {strides = array<i32>} : memref<2x8x256xf32, #tpu.memory_space<vmem>>, vector<1x8x256xf32>,
    return
  }
  func.func @transform_0(%arg0: i32, %arg1: i32) -> (i32, i32, i32) {
    %c0_i32 = arith.constant 0 : i32
    %c0_i32_0 = arith.constant 0 : i32
    return %arg0, %c0_i32, %arg1 : i32, i32, i32
  }
  func.func @transform_1(%arg0: i32, %arg1: i32) -> (i32, i32) {
    %c0_i32 = arith.constant 0 : i32
    %c0_i32_0 = arith.constant 0 : i32
    %c0_i32_1 = arith.constant 0 : i32
    return %c0_i32, %c0_i32_0 : i32, i32
  }
  func.func @transform_2(%arg0: i32, %arg1: i32) -> (i32, i32) {
    %c0_i32 = arith.constant 0 : i32
    %c0_i32_0 = arith.constant 0 : i32
    %c0_i32_1 = arith.constant 0 : i32
    return %c0_i32, %c0_i32_0 : i32, i32
  }
  func.func @transform_3(%arg0: i32, %arg1: i32) -> (i32, i32, i32) {
    %c0_i32 = arith.constant 0 : i32
    %c0_i32_0 = arith.constant 0 : i32
    return %arg0, %c0_i32, %arg1 : i32, i32, i32
  }
}

</mosaic_0001>

<llo_original>
// kernel: crossscale_forward.1
$region0: #{crossscale_forward.1}
  #allocation0 [shape = 'u32[]', space=smem, size = 0x4, offset = 0x4, fixed_abs, tag = 'smem constant byte address 0x4 - core index']
  #allocation1 [shape = 'u32[72,128]{1,0:T(1,128)}', space=vmem, size = 0x9000, scoped, tag = 'internal scratch']
  %s0 = inlined_call_operand.vmem [shape: f32[2,4,256], index: 0, kind: input, shape index: {}]
  %s1 = inlined_call_operand.vmem [shape: f32[8,4], index: 1, kind: input, shape index: {}]
  %s2 = inlined_call_operand.vmem [shape: f32[8,1], index: 2, kind: input, shape index: {}]
  %s3 = inlined_call_operand.vmem [shape: f32[2,8,256], index: 3, kind: output, shape index: {}]
  %s4 = sld [smem:[#allocation0]]
  $region22: #{crossscale_forward.1} parent=0
    _
  %s6 = ssub.s32 1, %s4
  %s7 = scalar_select 0, %s6, %s4
  // Predicated region
  $region2: #{crossscale_forward.1} parent=0 // pred_check
    _
  $region3: #{crossscale_forward.1} parent=0 // pred_check_branch
    %9 = sbr.rel (0) target = $region5
  $region4: #{crossscale_forward.1} parent=0 // pred_region
    _
  $region5: #{crossscale_forward.1} parent=0 // pred_fallthru
    _
  // Predicated region
  $region6: #{crossscale_forward.1} parent=0 // pred_check
    _
  $region7: #{crossscale_forward.1} parent=0 // pred_check_branch
    %11 = sbr.rel (0) target = $region9
  $region8: #{crossscale_forward.1} parent=0 // pred_region
    _
  $region9: #{crossscale_forward.1} parent=0 // pred_fallthru
    _
  // Predicated region
  $region10: #{crossscale_forward.1} parent=0 // pred_check
    _
  $region11: #{crossscale_forward.1} parent=0 // pred_check_branch
    %13 = sbr.rel (0) target = $region13
  $region12: #{crossscale_forward.1} parent=0 // pred_region
    _
  $region13: #{crossscale_forward.1} parent=0 // pred_fallthru
    _
  %v14 = vld [vmem:[%s1] sm:$0xff]
  %v15 = vld [vmem:[%s2] sm:$0xff]
  %v16 = vld [vmem:[%s0] sm:$0xff]
  %18 = vset.pattern.permute.xlu0 0
  %19 = vperm.xlu0 %18, %v15
  %v20 = vpop.permute.xlu0 %19
  %23 = vst [vmem:[#allocation1] ss:$2 sm:$0xff] %v16
  %v24 = vld.sshfl [vmem:[#allocation1] sm:$0xff pattern:$0x75316420]
  %v25 = vld.sshfl [vmem:[#allocation1 + $0x8] sm:$0xff pattern:$0x75316420]
  %vm26 = vcmask 31744
  %v28 = vsel %vm26, %v14, 0
  %vm30 = vcmask 1043456
  %v31 = vsel %vm30, %v24, 0
  %v33 = vsel %vm30, %v25, 0
  %35 = vmatpush.msra.mxu0 0.0
  %36 = vmatpush.msra.mxu0 0.0
  %37 = vmatpush.msra.mxu0 0.0
  %38 = vmatpush.msra.mxu0 0.0
  %39 = vmatpush.msra.mxu0 0.0
  %40 = vmatpush.msra.mxu0 0.0
  %41 = vmatpush.msra.mxu0 0.0
  %42 = vmatpush.msra.mxu0 0.0
  %43 = vmatpush.msra.mxu0 0.0
  %44 = vmatpush.msra.mxu0 0.0
  %45 = vmatpush.msra.mxu0 0.0
  %46 = vmatpush.msra.mxu0 0.0
  %47 = vmatpush.msra.mxu0 0.0
  %48 = vmatpush.msra.mxu0 0.0
  %49 = vmatpush.msra.mxu0 0.0
  %50 = vmatpush.msra.mxu0 %v31
  %51 = vmatmul.f32.gmra.mxu0 %v28
  %v52 = vpop.f32.mrf.mxu0
  %v53 = vadd.f32 %v20, %v52
  %54 = vdwg.mxu0
  %55 = vmatpush.msra.mxu0 0.0
  %56 = vmatpush.msra.mxu0 0.0
  %57 = vmatpush.msra.mxu0 0.0
  %58 = vmatpush.msra.mxu0 0.0
  %59 = vmatpush.msra.mxu0 0.0
  %60 = vmatpush.msra.mxu0 0.0
  %61 = vmatpush.msra.mxu0 0.0
  %62 = vmatpush.msra.mxu0 0.0
  %63 = vmatpush.msra.mxu0 0.0
  %64 = vmatpush.msra.mxu0 0.0
  %65 = vmatpush.msra.mxu0 0.0
  %66 = vmatpush.msra.mxu0 0.0
  %67 = vmatpush.msra.mxu0 0.0
  %68 = vmatpush.msra.mxu0 0.0
  %69 = vmatpush.msra.mxu0 0.0
  %70 = vmatpush.msra.mxu0 %v33
  %71 = vmatmul.f32.gmra.mxu0 %v28
  %v72 = vpop.f32.mrf.mxu0
  %v73 = vadd.f32 %v20, %v72
  %74 = vdwg.mxu0
  %75 = vst [vmem:[%s3] sm:$0xff] %v53
  %76 = vst [vmem:[%s3 + $0x8] sm:$0xff] %v73
  %s77 = scalar_lea.vmem %s0, 8
  %v78 = vld [vmem:[%s77] sm:$0xff]
  %80 = vst [vmem:[#allocation1] ss:$2 sm:$0xff] %v78
  %v81 = vld.sshfl [vmem:[#allocation1] sm:$0xff pattern:$0x75316420]
  %v82 = vld.sshfl [vmem:[#allocation1 + $0x8] sm:$0xff pattern:$0x75316420]
  %v83 = vsel %vm30, %v81, 0
  %v85 = vsel %vm30, %v82, 0
  %87 = vmatpush.msra.mxu0 0.0
  %88 = vmatpush.msra.mxu0 0.0
  %89 = vmatpush.msra.mxu0 0.0
  %90 = vmatpush.msra.mxu0 0.0
  %91 = vmatpush.msra.mxu0 0.0
  %92 = vmatpush.msra.mxu0 0.0
  %93 = vmatpush.msra.mxu0 0.0
  %94 = vmatpush.msra.mxu0 0.0
  %95 = vmatpush.msra.mxu0 0.0
  %96 = vmatpush.msra.mxu0 0.0
  %97 = vmatpush.msra.mxu0 0.0
  %98 = vmatpush.msra.mxu0 0.0
  %99 = vmatpush.msra.mxu0 0.0
  %100 = vmatpush.msra.mxu0 0.0
  %101 = vmatpush.msra.mxu0 0.0
  %102 = vmatpush.msra.mxu0 %v83
  %103 = vmatmul.f32.gmra.mxu0 %v28
  %v104 = vpop.f32.mrf.mxu0
  %v105 = vadd.f32 %v20, %v104
  %106 = vdwg.mxu0
  %107 = vmatpush.msra.mxu0 0.0
  %108 = vmatpush.msra.mxu0 0.0
  %109 = vmatpush.msra.mxu0 0.0
  %110 = vmatpush.msra.mxu0 0.0
  %111 = vmatpush.msra.mxu0 0.0
  %112 = vmatpush.msra.mxu0 0.0
  %113 = vmatpush.msra.mxu0 0.0
  %114 = vmatpush.msra.mxu0 0.0
  %115 = vmatpush.msra.mxu0 0.0
  %116 = vmatpush.msra.mxu0 0.0
  %117 = vmatpush.msra.mxu0 0.0
  %118 = vmatpush.msra.mxu0 0.0
  %119 = vmatpush.msra.mxu0 0.0
  %120 = vmatpush.msra.mxu0 0.0
  %121 = vmatpush.msra.mxu0 0.0
  %122 = vmatpush.msra.mxu0 %v85
  %123 = vmatmul.f32.gmra.mxu0 %v28
  %v124 = vpop.f32.mrf.mxu0
  %v125 = vadd.f32 %v20, %v124
  %126 = vdwg.mxu0
  %s127 = scalar_lea.vmem %s3, 16
  %128 = vst [vmem:[%s127] sm:$0xff] %v105
  %129 = vst [vmem:[%s127 + $0x8] sm:$0xff] %v125
  // Predicated region
  $region14: #{crossscale_forward.1} parent=0 // pred_check
    _
  $region15: #{crossscale_forward.1} parent=0 // pred_check_branch
    %131 = sbr.rel (0) target = $region17
  $region16: #{crossscale_forward.1} parent=0 // pred_region
    _
  $region17: #{crossscale_forward.1} parent=0 // pred_fallthru
    _
  // Predicated region
  $region18: #{crossscale_forward.1} parent=0 // pred_check
    _
  $region19: #{crossscale_forward.1} parent=0 // pred_check_branch
    %133 = sbr.rel (0) target = $region21
  $region20: #{crossscale_forward.1} parent=0 // pred_region
    _
  $region21: #{crossscale_forward.1} parent=0 // pred_fallthru
    _

</llo_original>
